<compile_context>
chip_gen: v6e
topology: v6e:2x2x1
jax: 0.10.0
libtpu: 0.0.40
codegen_flags: <defaults>
</compile_context>

<pallas_src>
import jax
import jax.numpy as jnp
import numpy as np
from jax.experimental import pallas as pl
from jax.experimental.pallas import tpu as pltpu


# ---------------- Fused Pallas kernel (entire forward pass) ----------------

def _gcn_fused_kernel(a_ref, x_ref, tb1_ref, tb2_ref, wfb_ref, bfb_ref, o_ref):
    A = a_ref[...]                                   # (N, N)

    def block(x2d, theta_big):
        # Graph convolution: lfs[n, (b,t,f)] = sum_j A[n, j] * x2d[j, (b,t,f)].
        lfs = jnp.dot(A, x2d, preferred_element_type=jnp.float32)
        # Per-(b,t) feature transform F->C as one lane-dense 2D matmul against
        # the block-diagonal expanded Theta, then ReLU (stays in vregs).
        t2 = jnp.maximum(
            jnp.dot(lfs, theta_big, preferred_element_type=jnp.float32), 0.0)
        # BatchNorm2d(num_nodes), training mode, default gamma=1 / beta=0:
        # per-node (per-row) biased stats over (batch, time, channel), computed
        # in a single pass (sum + sum of squares), f32 accumulation, EUP rsqrt.
        # TODO(synk): running_mean / running_var buffer updates (training-mode
        # side effect) are not materialized; they do not affect the output.
        inv_cnt = 1.0 / t2.shape[1]
        s = jnp.sum(t2, axis=1, keepdims=True)
        ss = jnp.sum(t2 * t2, axis=1, keepdims=True)
        mean = s * inv_cnt
        var = jnp.maximum(ss * inv_cnt - mean * mean, 0.0)
        return (t2 - mean) * jax.lax.rsqrt(var + 1e-5)

    out1 = block(x_ref[...], tb1_ref[...])           # (N, B*T*16)
    out2 = block(out1, tb2_ref[...])                 # (N, B*T*32)

    # Final Linear head as a single lane-dense matmul: out2 columns are ordered
    # (b, t, c), so multiplying by kron(I_B, Wf) applies Wf independently per
    # batch element and yields columns ordered (b, t_out).  One MXU op, one
    # unmasked store.
    o_ref[...] = (jnp.dot(out2, wfb_ref[...], preferred_element_type=jnp.float32)
                  + bfb_ref[...])


# ---------------- Model wrapper (parameter prep + single pallas_call) ------

def gcn_forward(X, A_hat, params):
    B, N, T, Fin = X.shape
    C2 = params["Theta2"].shape[1]
    T_out = params["Wf"].shape[1]
    BT = B * T

    # Node-major 2D slab, columns ordered (batch, time, feature).
    Xn = jnp.transpose(X, (1, 0, 2, 3)).reshape(N, BT * Fin)

    # Block-diagonal expanded weights, built once in the wrapper.  Keeps every
    # in-kernel op a plain lane-dense 2D matmul.
    eye_bt = jnp.eye(BT, dtype=jnp.float32)
    tb1 = jnp.kron(eye_bt, params["Theta1"].astype(jnp.float32))  # (BT*F,  BT*16)
    tb2 = jnp.kron(eye_bt, params["Theta2"].astype(jnp.float32))  # (BT*16, BT*32)

    eye_b = jnp.eye(B, dtype=jnp.float32)
    wfb = jnp.kron(eye_b, params["Wf"].astype(jnp.float32))       # (B*T*32, B*T_out)
    bfb = jnp.tile(params["bf"].astype(jnp.float32).reshape(1, T_out), (1, B))

    # Total footprint < 1 MiB -> single ungridded call, everything VMEM
    # resident (well under the default scoped-VMEM limit).
    out_nb = pl.pallas_call(
        _gcn_fused_kernel,
        out_shape=jax.ShapeDtypeStruct((N, B * T_out), jnp.float32),
        in_specs=[pl.BlockSpec(memory_space=pltpu.MemorySpace.VMEM)] * 6,
        out_specs=pl.BlockSpec(memory_space=pltpu.MemorySpace.VMEM),
    )(A_hat.astype(jnp.float32), Xn, tb1, tb2, wfb, bfb)

    # Layout plumbing back to the torch output shape (B, N, T_out); tiny.
    return jnp.transpose(out_nb.reshape(N, B, T_out), (1, 0, 2))


# ---------------- Pure-JAX reference (for verification) ----------------

def gcn_reference(X, A_hat, params):
    hp = jax.lax.Precision.HIGHEST

    def block(Xin, Theta):
        lfs = jnp.einsum("ij,bjtf->bitf", A_hat, Xin, precision=hp)
        t2 = jax.nn.relu(jnp.einsum("bitf,fc->bitc", lfs, Theta, precision=hp))
        mean = t2.mean(axis=(0, 2, 3), keepdims=True)
        var = ((t2 - mean) ** 2).mean(axis=(0, 2, 3), keepdims=True)
        return (t2 - mean) / jnp.sqrt(var + 1e-5)

    out1 = block(X, params["Theta1"])
    out2 = block(out1, params["Theta2"])
    B, N = out2.shape[:2]
    h = out2.reshape(B, N, -1)
    return jnp.einsum("bnk,ko->bno", h, params["Wf"], precision=hp) + params["bf"]


# ---------------- Main ----------------

if __name__ == "__main__":
    B, N, T, F, T_out = 2, 8, 8, 4, 4  # batch, nodes, timesteps_in, features, timesteps_out

    key = jax.random.PRNGKey(0)
    kx, ka, k1, k2, kw, kb = jax.random.split(key, 6)

    X = jax.random.normal(kx, (B, N, T, F), dtype=jnp.float32)
    A = jax.random.uniform(ka, (N, N), dtype=jnp.float32)
    A_hat = A / jnp.sum(A, axis=1, keepdims=True)  # row-normalized adjacency

    # Deterministic parameter init (matches PyTorch shapes / uniform ranges).
    s1 = 1.0 / np.sqrt(16.0)
    s2 = 1.0 / np.sqrt(32.0)
    sf = 1.0 / np.sqrt(T * 32.0)
    params = {
        "Theta1": jax.random.uniform(k1, (F, 16), jnp.float32, -s1, s1),
        "Theta2": jax.random.uniform(k2, (16, 32), jnp.float32, -s2, s2),
        "Wf": jax.random.uniform(kw, (T * 32, T_out), jnp.float32, -sf, sf),
        "bf": jax.random.uniform(kb, (1, T_out), jnp.float32, -sf, sf),
    }

    out = jax.block_until_ready(gcn_forward(X, A_hat, params))
    ref = gcn_reference(X, A_hat, params)

    assert out.shape == (B, N, T_out), out.shape
    assert jnp.allclose(out, ref, rtol=2e-2, atol=2e-2), \
        float(jnp.max(jnp.abs(out - ref)))

    print("KERNEL_OK")
</pallas_src>

<mosaic_0001>
module attributes {stable_mosaic.version = 11 : i64} {
  func.func @_gcn_fused_kernel(%arg0: memref<8x8xf32, #tpu.memory_space<vmem>>, %arg1: memref<8x64xf32, #tpu.memory_space<vmem>>, %arg2: memref<64x256xf32, #tpu.memory_space<vmem>>, %arg3: memref<256x512xf32, #tpu.memory_space<vmem>>, %arg4: memref<512x8xf32, #tpu.memory_space<vmem>>, %arg5: memref<1x8xf32, #tpu.memory_space<vmem>>, %arg6: memref<8x8xf32, #tpu.memory_space<vmem>>) attributes {dimension_semantics = [], scalar_prefetch = 0 : i64, scratch_operands = 0 : i64, tpu.core_type = #tpu.core_type<tc>} {
    %c0 = arith.constant 0 : index
    %c0_0 = arith.constant 0 : index
    %0 = vector.load %arg0[%c0, %c0_0] : memref<8x8xf32, #tpu.memory_space<vmem>>, vector<8x8xf32>
    %c0_1 = arith.constant 0 : index
    %c0_2 = arith.constant 0 : index
    %1 = vector.load %arg1[%c0_1, %c0_2] : memref<8x64xf32, #tpu.memory_space<vmem>>, vector<8x64xf32>
    %c0_3 = arith.constant 0 : index
    %c0_4 = arith.constant 0 : index
    %2 = vector.load %arg2[%c0_3, %c0_4] : memref<64x256xf32, #tpu.memory_space<vmem>>, vector<64x256xf32>
    %cst = arith.constant dense<0.000000e+00> : vector<8x64xf32>
    %3 = tpu.matmul %0, %1, %cst {dimension_numbers = #tpu.dot_dimension_numbers<[1], [0], [0], [1], [0, 0, 1, 1], [], []>} : vector<8x8xf32>, vector<8x64xf32>, vector<8x64xf32> -> vector<8x64xf32>
    %cst_5 = arith.constant dense<0.000000e+00> : vector<8x256xf32>
    %4 = tpu.matmul %3, %2, %cst_5 {dimension_numbers = #tpu.dot_dimension_numbers<[1], [0], [0], [1], [0, 0, 1, 1], [], []>} : vector<8x64xf32>, vector<64x256xf32>, vector<8x256xf32> -> vector<8x256xf32>
    %cst_6 = arith.constant 0.000000e+00 : f32
    %5 = vector.broadcast %cst_6 : f32 to vector<8x256xf32>
    %6 = arith.maximumf %4, %5 : vector<8x256xf32>
    %cst_7 = arith.constant dense<0.000000e+00> : vector<8xf32>
    %7 = vector.multi_reduction <add>, %6, %cst_7 [1] : vector<8x256xf32> to vector<8xf32>
    %8 = vector.shape_cast %7 : vector<8xf32> to vector<8x1xf32>
    %9 = arith.mulf %6, %6 : vector<8x256xf32>
    %cst_8 = arith.constant dense<0.000000e+00> : vector<8xf32>
    %10 = vector.multi_reduction <add>, %9, %cst_8 [1] : vector<8x256xf32> to vector<8xf32>
    %11 = vector.shape_cast %10 : vector<8xf32> to vector<8x1xf32>
    %cst_9 = arith.constant 3.906250e-03 : f32
    %12 = vector.broadcast %cst_9 : f32 to vector<8x1xf32>
    %13 = arith.mulf %8, %12 : vector<8x1xf32>
    %cst_10 = arith.constant 3.906250e-03 : f32
    %14 = vector.broadcast %cst_10 : f32 to vector<8x1xf32>
    %15 = arith.mulf %11, %14 : vector<8x1xf32>
    %16 = arith.mulf %13, %13 : vector<8x1xf32>
    %17 = arith.subf %15, %16 : vector<8x1xf32>
    %cst_11 = arith.constant 0.000000e+00 : f32
    %18 = vector.broadcast %cst_11 : f32 to vector<8x1xf32>
    %19 = arith.maximumf %17, %18 : vector<8x1xf32>
    %20 = vector.broadcast %13 : vector<8x1xf32> to vector<8x256xf32>
    %21 = arith.subf %6, %20 : vector<8x256xf32>
    %cst_12 = arith.constant 9.99999974E-6 : f32
    %22 = vector.broadcast %cst_12 : f32 to vector<8x1xf32>
    %23 = arith.addf %19, %22 : vector<8x1xf32>
    %24 = math.rsqrt %23 : vector<8x1xf32>
    %25 = vector.broadcast %24 : vector<8x1xf32> to vector<8x256xf32>
    %26 = arith.mulf %21, %25 : vector<8x256xf32>
    %c0_13 = arith.constant 0 : index
    %c0_14 = arith.constant 0 : index
    %27 = vector.load %arg3[%c0_13, %c0_14] : memref<256x512xf32, #tpu.memory_space<vmem>>, vector<256x512xf32>
    %cst_15 = arith.constant dense<0.000000e+00> : vector<8x256xf32>
    %28 = tpu.matmul %0, %26, %cst_15 {dimension_numbers = #tpu.dot_dimension_numbers<[1], [0], [0], [1], [0, 0, 1, 1], [], []>} : vector<8x8xf32>, vector<8x256xf32>, vector<8x256xf32> -> vector<8x256xf32>
    %cst_16 = arith.constant dense<0.000000e+00> : vector<8x512xf32>
    %29 = tpu.matmul %28, %27, %cst_16 {dimension_numbers = #tpu.dot_dimension_numbers<[1], [0], [0], [1], [0, 0, 1, 1], [], []>} : vector<8x256xf32>, vector<256x512xf32>, vector<8x512xf32> -> vector<8x512xf32>
    %cst_17 = arith.constant 0.000000e+00 : f32
    %30 = vector.broadcast %cst_17 : f32 to vector<8x512xf32>
    %31 = arith.maximumf %29, %30 : vector<8x512xf32>
    %cst_18 = arith.constant dense<0.000000e+00> : vector<8xf32>
    %32 = vector.multi_reduction <add>, %31, %cst_18 [1] : vector<8x512xf32> to vector<8xf32>
    %33 = vector.shape_cast %32 : vector<8xf32> to vector<8x1xf32>
    %34 = arith.mulf %31, %31 : vector<8x512xf32>
    %cst_19 = arith.constant dense<0.000000e+00> : vector<8xf32>
    %35 = vector.multi_reduction <add>, %34, %cst_19 [1] : vector<8x512xf32> to vector<8xf32>
    %36 = vector.shape_cast %35 : vector<8xf32> to vector<8x1xf32>
    %cst_20 = arith.constant 0.001953125 : f32
    %37 = vector.broadcast %cst_20 : f32 to vector<8x1xf32>
    %38 = arith.mulf %33, %37 : vector<8x1xf32>
    %cst_21 = arith.constant 0.001953125 : f32
    %39 = vector.broadcast %cst_21 : f32 to vector<8x1xf32>
    %40 = arith.mulf %36, %39 : vector<8x1xf32>
    %41 = arith.mulf %38, %38 : vector<8x1xf32>
    %42 = arith.subf %40, %41 : vector<8x1xf32>
    %cst_22 = arith.constant 0.000000e+00 : f32
    %43 = vector.broadcast %cst_22 : f32 to vector<8x1xf32>
    %44 = arith.maximumf %42, %43 : vector<8x1xf32>
    %45 = vector.broadcast %38 : vector<8x1xf32> to vector<8x512xf32>
    %46 = arith.subf %31, %45 : vector<8x512xf32>
    %cst_23 = arith.constant 9.99999974E-6 : f32
    %47 = vector.broadcast %cst_23 : f32 to vector<8x1xf32>
    %48 = arith.addf %44, %47 : vector<8x1xf32>
    %49 = math.rsqrt %48 : vector<8x1xf32>
    %50 = vector.broadcast %49 : vector<8x1xf32> to vector<8x512xf32>
    %51 = arith.mulf %46, %50 : vector<8x512xf32>
    %c0_24 = arith.constant 0 : index
    %c0_25 = arith.constant 0 : index
    %52 = vector.load %arg4[%c0_24, %c0_25] : memref<512x8xf32, #tpu.memory_space<vmem>>, vector<512x8xf32>
    %cst_26 = arith.constant dense<0.000000e+00> : vector<8x8xf32>
    %53 = tpu.matmul %51, %52, %cst_26 {dimension_numbers = #tpu.dot_dimension_numbers<[1], [0], [0], [1], [0, 0, 1, 1], [], []>} : vector<8x512xf32>, vector<512x8xf32>, vector<8x8xf32> -> vector<8x8xf32>
    %c0_27 = arith.constant 0 : index
    %c0_28 = arith.constant 0 : index
    %54 = vector.load %arg5[%c0_27, %c0_28] : memref<1x8xf32, #tpu.memory_space<vmem>>, vector<1x8xf32>
    %55 = vector.broadcast %54 : vector<1x8xf32> to vector<8x8xf32>
    %56 = arith.addf %53, %55 : vector<8x8xf32>
    %c0_29 = arith.constant 0 : index
    %c0_30 = arith.constant 0 : index
    %57 = vector.load %arg6[%c0_29, %c0_30] : memref<8x8xf32, #tpu.memory_space<vmem>>, vector<8x8xf32>
    tpu.vector_store %arg6[%c0_29, %c0_30], %56 {strides = array<i32>} : memref<8x8xf32, #tpu.memory_space<vmem>>, vector<8x8xf32>,
    return
  }
}

</mosaic_0001>

<llo_original>
// kernel: tpu_custom_call.1
$region0: #{tpu_custom_call.1}
  #allocation0 [shape = 'u32[]', space=smem, size = 0x4, offset = 0x4, fixed_abs, tag = 'smem constant byte address 0x4 - core index']
  #allocation1 [shape = 'u32[144,128]{1,0:T(1,128)}', space=vmem, size = 0x12000, scoped, tag = 'internal scratch']
  %s0 = inlined_call_operand.vmem [shape: f32[8,8], index: 0, kind: input, shape index: {}]
  %s1 = inlined_call_operand.vmem [shape: f32[8,64], index: 1, kind: input, shape index: {}]
  %s2 = inlined_call_operand.vmem [shape: f32[64,256], index: 2, kind: input, shape index: {}]
  %s3 = inlined_call_operand.hbm [shape: f32[256,512], index: 3, kind: input, shape index: {}]
  %s4 = inlined_call_operand.vmem [shape: f32[512,8], index: 4, kind: input, shape index: {}]
  %s5 = inlined_call_operand.vmem [shape: f32[1,8], index: 5, kind: input, shape index: {}]
  %s6 = inlined_call_operand.hbm [shape: f32[8,8], index: 6, kind: output, shape index: {}]
  %s7 = sld [smem:[#allocation0]]
  $region38: #{tpu_custom_call.1} parent=0
    _
  %s9 = ssub.s32 1, %s7
  %s10 = scalar_select 0, %s9, %s7
  $region1: #{tpu_custom_call.1} parent=0
    #allocation2 [shape = 'u8[524288]{0}', space=vmem, size = 0x80000, scoped, tag = 'input window, operand 3, single buffered']
    #allocation3 [shape = 's32[1]{0}', space=sflag, size = 0x4, scoped, tag = 'scoped memory for tpu_custom_call.1']
    #allocation4 [shape = 's32[1]{0}', space=sflag, size = 0x4, scoped, tag = 'scoped memory for tpu_custom_call.1']
    #allocation5 [shape = 'u8[4096]{0}', space=vmem, size = 0x1000, scoped, tag = 'output window, operand 0, single buffered']
    %11 = vsyncpa [#allocation3], 0
    %12 = vsyncpa [#allocation4], 0
    // Predicated region
    $region2: #{tpu_custom_call.1} parent=1 // pred_check
      _
    $region3: #{tpu_custom_call.1} parent=1 // pred_check_branch
      %14 = sbr.rel (0) target = $region5
    $region4: #{tpu_custom_call.1} parent=1 // pred_region
      _
    $region5: #{tpu_custom_call.1} parent=1 // pred_fallthru
      _
    // Predicated region
    $region6: #{tpu_custom_call.1} parent=1 // pred_check
      _
    $region7: #{tpu_custom_call.1} parent=1 // pred_check_branch
      %16 = sbr.rel (0) target = $region9
    $region8: #{tpu_custom_call.1} parent=1 // pred_region
      _
    $region9: #{tpu_custom_call.1} parent=1 // pred_fallthru
      _
    // Predicated region
    $region10: #{tpu_custom_call.1} parent=1 // pred_check
      _
    $region11: #{tpu_custom_call.1} parent=1 // pred_check_branch
      %18 = sbr.rel (0) target = $region13
    $region12: #{tpu_custom_call.1} parent=1 // pred_region
      _
    $region13: #{tpu_custom_call.1} parent=1 // pred_fallthru
      _
    // Predicated region
    $region14: #{tpu_custom_call.1} parent=1 // pred_check
      _
    $region15: #{tpu_custom_call.1} parent=1 // pred_check_branch
      %20 = sbr.rel (0) target = $region17
    $region16: #{tpu_custom_call.1} parent=1 // pred_region
      %s22 = ssub.s32 16384, 16384
      %23 = vsyncadd [#allocation3], %s22
      %s24 = sshll.u32 [#allocation2], 4
      %s25 = int_to_ptr.vmem [resolvable:$true] %s24
      %30 = dma.hbm_to_vmem [thread:$0]  %s3, 16384, %s25, [#allocation3], 512, 512, 32
    $region17: #{tpu_custom_call.1} parent=1 // pred_fallthru
      _
    // Predicated region
    $region18: #{tpu_custom_call.1} parent=1 // pred_check
      _
    $region19: #{tpu_custom_call.1} parent=1 // pred_check_branch
      %32 = sbr.rel (0) target = $region21
    $region20: #{tpu_custom_call.1} parent=1 // pred_region
      _
    $region21: #{tpu_custom_call.1} parent=1 // pred_fallthru
      _
    // Predicated region
    $region22: #{tpu_custom_call.1} parent=1 // pred_check
      _
    $region23: #{tpu_custom_call.1} parent=1 // pred_check_branch
      %34 = sbr.rel (0) target = $region25
    $region24: #{tpu_custom_call.1} parent=1 // pred_region
      _
    $region25: #{tpu_custom_call.1} parent=1 // pred_fallthru
      _
    // Predicated region
    $region26: #{tpu_custom_call.1} parent=1 // pred_check
      _
    $region27: #{tpu_custom_call.1} parent=1 // pred_check_branch
      %36 = sbr.rel (0) target = $region29
    $region28: #{tpu_custom_call.1} parent=1 // pred_region
      %37 = dma.done [#allocation3], 16384
    $region29: #{tpu_custom_call.1} parent=1 // pred_fallthru
      _
    %v38 = vld [vmem:[%s0] sm:$0xff]
    %v39 = vld [vmem:[%s1] sm:$0xff]
    %v40 = vld [vmem:[%s2] sm:$0xff]
    %v41 = vld [vmem:[%s2 + $0x8] sm:$0xff]
    %v42 = vld [vmem:[%s2 + $0x10] sm:$0xff]
    %v43 = vld [vmem:[%s2 + $0x18] sm:$0xff]
    %v44 = vld [vmem:[%s2 + $0x20] sm:$0xff]
    %v45 = vld [vmem:[%s2 + $0x28] sm:$0xff]
    %v46 = vld [vmem:[%s2 + $0x30] sm:$0xff]
    %v47 = vld [vmem:[%s2 + $0x38] sm:$0xff]
    %v48 = vld [vmem:[%s2 + $0x40] sm:$0xff]
    %v49 = vld [vmem:[%s2 + $0x48] sm:$0xff]
    %v50 = vld [vmem:[%s2 + $0x50] sm:$0xff]
    %v51 = vld [vmem:[%s2 + $0x58] sm:$0xff]
    %v52 = vld [vmem:[%s2 + $0x60] sm:$0xff]
    %v53 = vld [vmem:[%s2 + $0x68] sm:$0xff]
    %v54 = vld [vmem:[%s2 + $0x70] sm:$0xff]
    %v55 = vld [vmem:[%s2 + $0x78] sm:$0xff]
    %vm56 = vcmask 64512
    %v58 = vsel %vm56, %v38, 0
    %60 = vmatprep.subr.mxu0 0.0
    %61 = vmatpush1.msra.mxu0 0.0
    %62 = vmatprep.subr.mxu0 0.0
    %63 = vmatpush1.msra.mxu0 0.0
    %64 = vmatprep.subr.mxu0 0.0
    %65 = vmatpush1.msra.mxu0 0.0
    %66 = vmatprep.subr.mxu0 0.0
    %67 = vmatpush1.msra.mxu0 0.0
    %68 = vmatprep.subr.mxu0 0.0
    %69 = vmatpush1.msra.mxu0 0.0
    %70 = vmatprep.subr.mxu0 0.0
    %71 = vmatpush1.msra.mxu0 0.0
    %72 = vmatprep.subr.mxu0 0.0
    %73 = vmatpush1.msra.mxu0 0.0
    %74 = vmatprep.subr.mxu0 0.0
    %75 = vmatpush1.msra.mxu0 0.0
    %76 = vmatprep.subr.mxu0 0.0
    %77 = vmatpush1.msra.mxu0 0.0
    %78 = vmatprep.subr.mxu0 0.0
    %79 = vmatpush1.msra.mxu0 0.0
    %80 = vmatprep.subr.mxu0 0.0
    %81 = vmatpush1.msra.mxu0 0.0
    %82 = vmatprep.subr.mxu0 0.0
    %83 = vmatpush1.msra.mxu0 0.0
    %84 = vmatprep.subr.mxu0 0.0
    %85 = vmatpush1.msra.mxu0 0.0
    %86 = vmatprep.subr.mxu0 0.0
    %87 = vmatpush1.msra.mxu0 0.0
    %88 = vmatprep.subr.mxu0 0.0
    %89 = vmatpush1.msra.mxu0 0.0
    %90 = vmatprep.subr.mxu0 0.0
    %91 = vmatpush1.msra.mxu0 %v39
    %92 = vmatprep.subr.mxu0 0.0
    %93 = vmatpush2.msra.mxu0 0.0
    %94 = vmatprep.subr.mxu0 0.0
    %95 = vmatpush2.msra.mxu0 0.0
    %96 = vmatprep.subr.mxu0 0.0
    %97 = vmatpush2.msra.mxu0 0.0
    %98 = vmatprep.subr.mxu0 0.0
    %99 = vmatpush2.msra.mxu0 0.0
    %100 = vmatprep.subr.mxu0 0.0
    %101 = vmatpush2.msra.mxu0 0.0
    %102 = vmatprep.subr.mxu0 0.0
    %103 = vmatpush2.msra.mxu0 0.0
    %104 = vmatprep.subr.mxu0 0.0
    %105 = vmatpush2.msra.mxu0 0.0
    %106 = vmatprep.subr.mxu0 0.0
    %107 = vmatpush2.msra.mxu0 0.0
    %108 = vmatprep.subr.mxu0 0.0
    %109 = vmatpush2.msra.mxu0 0.0
    %110 = vmatprep.subr.mxu0 0.0
    %111 = vmatpush2.msra.mxu0 0.0
    %112 = vmatprep.subr.mxu0 0.0
    %113 = vmatpush2.msra.mxu0 0.0
    %114 = vmatprep.subr.mxu0 0.0
    %115 = vmatpush2.msra.mxu0 0.0
    %116 = vmatprep.subr.mxu0 0.0
    %117 = vmatpush2.msra.mxu0 0.0
    %118 = vmatprep.subr.mxu0 0.0
    %119 = vmatpush2.msra.mxu0 0.0
    %120 = vmatprep.subr.mxu0 0.0
    %121 = vmatpush2.msra.mxu0 0.0
    %122 = vmatprep.subr.mxu0 0.0
    %123 = vmatpush2.msra.mxu0 0.0
    %124 = vmatprep.mubr.f32.mxu0 0.0
    %125 = vmatmul.mubr.f32.gmra.mxu0 %v58
    %v126 = vpop.f32.mrf.mxu0
    %v127 = vadd.f32 0.0, %v126
    %v128 = vpop.f32.mrf.mxu0
    %129 = vdwg.mxu0
    %vm130 = vcmask 523264
    %v132 = vsel %vm130, %v127, 0
    %134 = vmatprep.subr.mxu0 0.0
    %135 = vmatpush1.msra.mxu0 0.0
    %136 = vmatprep.subr.mxu0 0.0
    %137 = vmatpush1.msra.mxu0 0.0
    %138 = vmatprep.subr.mxu0 0.0
    %139 = vmatpush1.msra.mxu0 0.0
    %140 = vmatprep.subr.mxu0 0.0
    %141 = vmatpush1.msra.mxu0 0.0
    %142 = vmatprep.subr.mxu0 0.0
    %143 = vmatpush1.msra.mxu0 0.0
    %144 = vmatprep.subr.mxu0 0.0
    %145 = vmatpush1.msra.mxu0 0.0
    %146 = vmatprep.subr.mxu0 0.0
    %147 = vmatpush1.msra.mxu0 0.0
    %148 = vmatprep.subr.mxu0 0.0
    %149 = vmatpush1.msra.mxu0 0.0
    %150 = vmatprep.subr.mxu0 %v55
    %151 = vmatpush1.msra.mxu0 %v54
    %152 = vmatprep.subr.mxu0 %v53
    %153 = vmatpush1.msra.mxu0 %v52
    %154 = vmatprep.subr.mxu0 %v51
    %155 = vmatpush1.msra.mxu0 %v50
    %156 = vmatprep.subr.mxu0 %v49
    %157 = vmatpush1.msra.mxu0 %v48
    %158 = vmatprep.subr.mxu0 %v47
    %159 = vmatpush1.msra.mxu0 %v46
    %160 = vmatprep.subr.mxu0 %v45
    %161 = vmatpush1.msra.mxu0 %v44
    %162 = vmatprep.subr.mxu0 %v43
    %163 = vmatpush1.msra.mxu0 %v42
    %164 = vmatprep.subr.mxu0 %v41
    %165 = vmatpush1.msra.mxu0 %v40
    %166 = vmatprep.subr.mxu0 0.0
    %167 = vmatpush2.msra.mxu0 0.0
    %168 = vmatprep.subr.mxu0 0.0
    %169 = vmatpush2.msra.mxu0 0.0
    %170 = vmatprep.subr.mxu0 0.0
    %171 = vmatpush2.msra.mxu0 0.0
    %172 = vmatprep.subr.mxu0 0.0
    %173 = vmatpush2.msra.mxu0 0.0
    %174 = vmatprep.subr.mxu0 0.0
    %175 = vmatpush2.msra.mxu0 0.0
    %176 = vmatprep.subr.mxu0 0.0
    %177 = vmatpush2.msra.mxu0 0.0
    %178 = vmatprep.subr.mxu0 0.0
    %179 = vmatpush2.msra.mxu0 0.0
    %180 = vmatprep.subr.mxu0 0.0
    %181 = vmatpush2.msra.mxu0 0.0
    %182 = vmatprep.subr.mxu0 0.0
    %183 = vmatpush2.msra.mxu0 0.0
    %184 = vmatprep.subr.mxu0 0.0
    %185 = vmatpush2.msra.mxu0 0.0
    %186 = vmatprep.subr.mxu0 0.0
    %187 = vmatpush2.msra.mxu0 0.0
    %188 = vmatprep.subr.mxu0 0.0
    %189 = vmatpush2.msra.mxu0 0.0
    %190 = vmatprep.subr.mxu0 0.0
    %191 = vmatpush2.msra.mxu0 0.0
    %192 = vmatprep.subr.mxu0 0.0
    %193 = vmatpush2.msra.mxu0 0.0
    %194 = vmatprep.subr.mxu0 0.0
    %195 = vmatpush2.msra.mxu0 0.0
    %196 = vmatprep.subr.mxu0 0.0
    %197 = vmatpush2.msra.mxu0 0.0
    %198 = vmatprep.mubr.f32.mxu0 0.0
    %199 = vmatmul.mubr.f32.gmra.mxu0 %v132
    %v200 = vpop.f32.mrf.mxu0
    %v201 = vadd.f32 0.0, %v200
    %v202 = vpop.f32.mrf.mxu0
    %v203 = vadd.f32 0.0, %v202
    %204 = vdwg.mxu0
    %v205 = vmax.f32 %v201, 0.0
    %v206 = vmax.f32 %v203, 0.0
    %v207 = vadd.f32 %v205, %v206
    %208 = vadd.xlane.f32.xlu0 %v207
    %v209 = vpop.xlane.xlu0 %208
    %v210 = vmul.f32 %v205, %v205
    %v211 = vmul.f32 %v206, %v206
    %v212 = vadd.f32 %v210, %v211
    %213 = vadd.xlane.f32.xlu0 %v212
    %v214 = vpop.xlane.xlu0 %213
    %v215 = vmul.f32 %v209, 0.00390625
    %v216 = vmul.f32 %v214, 0.00390625
    %v217 = vmul.f32 %v215, %v215
    %v218 = vsub.f32 %v216, %v217
    %v219 = vmax.f32 %v218, 0.0
    %v220 = vsub.f32 %v205, %v215
    %v221 = vsub.f32 %v206, %v215
    %v222 = vadd.f32 %v219, 1e-05
    %v223 = vrsqrt.pop %v222
    %v224 = vmul.f32 %v220, %v223
    %v225 = vmul.f32 %v221, %v223
    %v226 = vld [vmem:[#allocation2] sm:$0xff]
    %v227 = vld [vmem:[#allocation2 + $0x8] sm:$0xff]
    %v228 = vld [vmem:[#allocation2 + $0x10] sm:$0xff]
    %v229 = vld [vmem:[#allocation2 + $0x18] sm:$0xff]
    %v230 = vld [vmem:[#allocation2 + $0x20] sm:$0xff]
    %v231 = vld [vmem:[#allocation2 + $0x28] sm:$0xff]
    %v232 = vld [vmem:[#allocation2 + $0x30] sm:$0xff]
    %v233 = vld [vmem:[#allocation2 + $0x38] sm:$0xff]
    %v234 = vld [vmem:[#allocation2 + $0x40] sm:$0xff]
    %v235 = vld [vmem:[#allocation2 + $0x48] sm:$0xff]
    %v236 = vld [vmem:[#allocation2 + $0x50] sm:$0xff]
    %v237 = vld [vmem:[#allocation2 + $0x58] sm:$0xff]
    %v238 = vld [vmem:[#allocation2 + $0x60] sm:$0xff]
    %v239 = vld [vmem:[#allocation2 + $0x68] sm:$0xff]
    %v240 = vld [vmem:[#allocation2 + $0x70] sm:$0xff]
    %v241 = vld [vmem:[#allocation2 + $0x78] sm:$0xff]
    %v242 = vld [vmem:[#allocation2 + $0x80] sm:$0xff]
    %v243 = vld [vmem:[#allocation2 + $0x88] sm:$0xff]
    %v244 = vld [vmem:[#allocation2 + $0x90] sm:$0xff]
    %v245 = vld [vmem:[#allocation2 + $0x98] sm:$0xff]
    %v246 = vld [vmem:[#allocation2 + $0xa0] sm:$0xff]
    %v247 = vld [vmem:[#allocation2 + $0xa8] sm:$0xff]
    %v248 = vld [vmem:[#allocation2 + $0xb0] sm:$0xff]
    %v249 = vld [vmem:[#allocation2 + $0xb8] sm:$0xff]
    %v250 = vld [vmem:[#allocation2 + $0xc0] sm:$0xff]
    %v251 = vld [vmem:[#allocation2 + $0xc8] sm:$0xff]
    %v252 = vld [vmem:[#allocation2 + $0xd0] sm:$0xff]
    %v253 = vld [vmem:[#allocation2 + $0xd8] sm:$0xff]
    %v254 = vld [vmem:[#allocation2 + $0xe0] sm:$0xff]
    %v255 = vld [vmem:[#allocation2 + $0xe8] sm:$0xff]
    %v256 = vld [vmem:[#allocation2 + $0xf0] sm:$0xff]
    %v257 = vld [vmem:[#allocation2 + $0xf8] sm:$0xff]
    %v258 = vld [vmem:[#allocation2 + $0x100] sm:$0xff]
    %v259 = vld [vmem:[#allocation2 + $0x108] sm:$0xff]
    %v260 = vld [vmem:[#allocation2 + $0x110] sm:$0xff]
    %v261 = vld [vmem:[#allocation2 + $0x118] sm:$0xff]
    %v262 = vld [vmem:[#allocation2 + $0x120] sm:$0xff]
    %v263 = vld [vmem:[#allocation2 + $0x128] sm:$0xff]
    %v264 = vld [vmem:[#allocation2 + $0x130] sm:$0xff]
    %v265 = vld [vmem:[#allocation2 + $0x138] sm:$0xff]
    %v266 = vld [vmem:[#allocation2 + $0x140] sm:$0xff]
    %v267 = vld [vmem:[#allocation2 + $0x148] sm:$0xff]
    %v268 = vld [vmem:[#allocation2 + $0x150] sm:$0xff]
    %v269 = vld [vmem:[#allocation2 + $0x158] sm:$0xff]
    %v270 = vld [vmem:[#allocation2 + $0x160] sm:$0xff]
    %v271 = vld [vmem:[#allocation2 + $0x168] sm:$0xff]
    %v272 = vld [vmem:[#allocation2 + $0x170] sm:$0xff]
    %v273 = vld [vmem:[#allocation2 + $0x178] sm:$0xff]
    %v274 = vld [vmem:[#allocation2 + $0x180] sm:$0xff]
    %v275 = vld [vmem:[#allocation2 + $0x188] sm:$0xff]
    %v276 = vld [vmem:[#allocation2 + $0x190] sm:$0xff]
    %v277 = vld [vmem:[#allocation2 + $0x198] sm:$0xff]
    %v278 = vld [vmem:[#allocation2 + $0x1a0] sm:$0xff]
    %v279 = vld [vmem:[#allocation2 + $0x1a8] sm:$0xff]
    %v280 = vld [vmem:[#allocation2 + $0x1b0] sm:$0xff]
    %v281 = vld [vmem:[#allocation2 + $0x1b8] sm:$0xff]
    %v282 = vld [vmem:[#allocation2 + $0x1c0] sm:$0xff]
    %v283 = vld [vmem:[#allocation2 + $0x1c8] sm:$0xff]
    %v284 = vld [vmem:[#allocation2 + $0x1d0] sm:$0xff]
    %v285 = vld [vmem:[#allocation2 + $0x1d8] sm:$0xff]
    %v286 = vld [vmem:[#allocation2 + $0x1e0] sm:$0xff]
    %v287 = vld [vmem:[#allocation2 + $0x1e8] sm:$0xff]
    %v288 = vld [vmem:[#allocation2 + $0x1f0] sm:$0xff]
    %v289 = vld [vmem:[#allocation2 + $0x1f8] sm:$0xff]
    %v290 = vld [vmem:[#allocation2 + $0x200] sm:$0xff]
    %v291 = vld [vmem:[#allocation2 + $0x208] sm:$0xff]
    %v292 = vld [vmem:[#allocation2 + $0x210] sm:$0xff]
    %v293 = vld [vmem:[#allocation2 + $0x218] sm:$0xff]
    %v294 = vld [vmem:[#allocation2 + $0x220] sm:$0xff]
    %v295 = vld [vmem:[#allocation2 + $0x228] sm:$0xff]
    %v296 = vld [vmem:[#allocation2 + $0x230] sm:$0xff]
    %v297 = vld [vmem:[#allocation2 + $0x238] sm:$0xff]
    %v298 = vld [vmem:[#allocation2 + $0x240] sm:$0xff]
    %v299 = vld [vmem:[#allocation2 + $0x248] sm:$0xff]
    %v300 = vld [vmem:[#allocation2 + $0x250] sm:$0xff]
    %v301 = vld [vmem:[#allocation2 + $0x258] sm:$0xff]
    %v302 = vld [vmem:[#allocation2 + $0x260] sm:$0xff]
    %v303 = vld [vmem:[#allocation2 + $0x268] sm:$0xff]
    %v304 = vld [vmem:[#allocation2 + $0x270] sm:$0xff]
    %v305 = vld [vmem:[#allocation2 + $0x278] sm:$0xff]
    %v306 = vld [vmem:[#allocation2 + $0x280] sm:$0xff]
    %v307 = vld [vmem:[#allocation2 + $0x288] sm:$0xff]
    %v308 = vld [vmem:[#allocation2 + $0x290] sm:$0xff]
    %v309 = vld [vmem:[#allocation2 + $0x298] sm:$0xff]
    %v310 = vld [vmem:[#allocation2 + $0x2a0] sm:$0xff]
    %v311 = vld [vmem:[#allocation2 + $0x2a8] sm:$0xff]
    %v312 = vld [vmem:[#allocation2 + $0x2b0] sm:$0xff]
    %v313 = vld [vmem:[#allocation2 + $0x2b8] sm:$0xff]
    %v314 = vld [vmem:[#allocation2 + $0x2c0] sm:$0xff]
    %v315 = vld [vmem:[#allocation2 + $0x2c8] sm:$0xff]
    %v316 = vld [vmem:[#allocation2 + $0x2d0] sm:$0xff]
    %v317 = vld [vmem:[#allocation2 + $0x2d8] sm:$0xff]
    %v318 = vld [vmem:[#allocation2 + $0x2e0] sm:$0xff]
    %v319 = vld [vmem:[#allocation2 + $0x2e8] sm:$0xff]
    %v320 = vld [vmem:[#allocation2 + $0x2f0] sm:$0xff]
    %v321 = vld [vmem:[#allocation2 + $0x2f8] sm:$0xff]
    %v322 = vld [vmem:[#allocation2 + $0x300] sm:$0xff]
    %v323 = vld [vmem:[#allocation2 + $0x308] sm:$0xff]
    %v324 = vld [vmem:[#allocation2 + $0x310] sm:$0xff]
    %v325 = vld [vmem:[#allocation2 + $0x318] sm:$0xff]
    %v326 = vld [vmem:[#allocation2 + $0x320] sm:$0xff]
    %v327 = vld [vmem:[#allocation2 + $0x328] sm:$0xff]
    %v328 = vld [vmem:[#allocation2 + $0x330] sm:$0xff]
    %v329 = vld [vmem:[#allocation2 + $0x338] sm:$0xff]
    %v330 = vld [vmem:[#allocation2 + $0x340] sm:$0xff]
    %v331 = vld [vmem:[#allocation2 + $0x348] sm:$0xff]
    %v332 = vld [vmem:[#allocation2 + $0x350] sm:$0xff]
    %v333 = vld [vmem:[#allocation2 + $0x358] sm:$0xff]
    %v334 = vld [vmem:[#allocation2 + $0x360] sm:$0xff]
    %v335 = vld [vmem:[#allocation2 + $0x368] sm:$0xff]
    %v336 = vld [vmem:[#allocation2 + $0x370] sm:$0xff]
    %v337 = vld [vmem:[#allocation2 + $0x378] sm:$0xff]
    %v338 = vld [vmem:[#allocation2 + $0x380] sm:$0xff]
    %v339 = vld [vmem:[#allocation2 + $0x388] sm:$0xff]
    %v340 = vld [vmem:[#allocation2 + $0x390] sm:$0xff]
    %v341 = vld [vmem:[#allocation2 + $0x398] sm:$0xff]
    %v342 = vld [vmem:[#allocation2 + $0x3a0] sm:$0xff]
    %v343 = vld [vmem:[#allocation2 + $0x3a8] sm:$0xff]
    %v344 = vld [vmem:[#allocation2 + $0x3b0] sm:$0xff]
    %v345 = vld [vmem:[#allocation2 + $0x3b8] sm:$0xff]
    %v346 = vld [vmem:[#allocation2 + $0x3c0] sm:$0xff]
    %v347 = vld [vmem:[#allocation2 + $0x3c8] sm:$0xff]
    %v348 = vld [vmem:[#allocation2 + $0x3d0] sm:$0xff]
    %v349 = vld [vmem:[#allocation2 + $0x3d8] sm:$0xff]
    %v350 = vld [vmem:[#allocation2 + $0x3e0] sm:$0xff]
    %v351 = vld [vmem:[#allocation2 + $0x3e8] sm:$0xff]
    %v352 = vld [vmem:[#allocation2 + $0x3f0] sm:$0xff]
    %v353 = vld [vmem:[#allocation2 + $0x3f8] sm:$0xff]
    %354 = vmatprep.subr.mxu0 0.0
    %355 = vmatpush1.msra.mxu0 0.0
    %356 = vmatprep.subr.mxu0 0.0
    %357 = vmatpush1.msra.mxu0 0.0
    %358 = vmatprep.subr.mxu0 0.0
    %359 = vmatpush1.msra.mxu0 0.0
    %360 = vmatprep.subr.mxu0 0.0
    %361 = vmatpush1.msra.mxu0 0.0
    %362 = vmatprep.subr.mxu0 0.0
    %363 = vmatpush1.msra.mxu0 0.0
    %364 = vmatprep.subr.mxu0 0.0
    %365 = vmatpush1.msra.mxu0 0.0
    %366 = vmatprep.subr.mxu0 0.0
    %367 = vmatpush1.msra.mxu0 0.0
    %368 = vmatprep.subr.mxu0 0.0
    %369 = vmatpush1.msra.mxu0 0.0
    %370 = vmatprep.subr.mxu0 0.0
    %371 = vmatpush1.msra.mxu0 0.0
    %372 = vmatprep.subr.mxu0 0.0
    %373 = vmatpush1.msra.mxu0 0.0
    %374 = vmatprep.subr.mxu0 0.0
    %375 = vmatpush1.msra.mxu0 0.0
    %376 = vmatprep.subr.mxu0 0.0
    %377 = vmatpush1.msra.mxu0 0.0
    %378 = vmatprep.subr.mxu0 0.0
    %379 = vmatpush1.msra.mxu0 0.0
    %380 = vmatprep.subr.mxu0 0.0
    %381 = vmatpush1.msra.mxu0 0.0
    %382 = vmatprep.subr.mxu0 0.0
    %383 = vmatpush1.msra.mxu0 0.0
    %384 = vmatprep.subr.mxu0 %v225
    %385 = vmatpush1.msra.mxu0 %v224
    %386 = vmatprep.subr.mxu0 0.0
    %387 = vmatpush2.msra.mxu0 0.0
    %388 = vmatprep.subr.mxu0 0.0
    %389 = vmatpush2.msra.mxu0 0.0
    %390 = vmatprep.subr.mxu0 0.0
    %391 = vmatpush2.msra.mxu0 0.0
    %392 = vmatprep.subr.mxu0 0.0
    %393 = vmatpush2.msra.mxu0 0.0
    %394 = vmatprep.subr.mxu0 0.0
    %395 = vmatpush2.msra.mxu0 0.0
    %396 = vmatprep.subr.mxu0 0.0
    %397 = vmatpush2.msra.mxu0 0.0
    %398 = vmatprep.subr.mxu0 0.0
    %399 = vmatpush2.msra.mxu0 0.0
    %400 = vmatprep.subr.mxu0 0.0
    %401 = vmatpush2.msra.mxu0 0.0
    %402 = vmatprep.subr.mxu0 0.0
    %403 = vmatpush2.msra.mxu0 0.0
    %404 = vmatprep.subr.mxu0 0.0
    %405 = vmatpush2.msra.mxu0 0.0
    %406 = vmatprep.subr.mxu0 0.0
    %407 = vmatpush2.msra.mxu0 0.0
    %408 = vmatprep.subr.mxu0 0.0
    %409 = vmatpush2.msra.mxu0 0.0
    %410 = vmatprep.subr.mxu0 0.0
    %411 = vmatpush2.msra.mxu0 0.0
    %412 = vmatprep.subr.mxu0 0.0
    %413 = vmatpush2.msra.mxu0 0.0
    %414 = vmatprep.subr.mxu0 0.0
    %415 = vmatpush2.msra.mxu0 0.0
    %416 = vmatprep.subr.mxu0 0.0
    %417 = vmatpush2.msra.mxu0 0.0
    %418 = vmatprep.mubr.f32.mxu0 0.0
    %419 = vmatmul.mubr.f32.gmra.mxu0 %v58
    %v420 = vpop.f32.mrf.mxu0
    %v421 = vadd.f32 0.0, %v420
    %v422 = vpop.f32.mrf.mxu0
    %v423 = vadd.f32 0.0, %v422
    %424 = vdwg.mxu0
    %425 = vmatprep.subr.mxu0 %v287
    %426 = vmatpush1.msra.mxu0 %v286
    %427 = vmatprep.subr.mxu0 %v283
    %428 = vmatpush1.msra.mxu0 %v282
    %429 = vmatprep.subr.mxu0 %v279
    %430 = vmatpush1.msra.mxu0 %v278
    %431 = vmatprep.subr.mxu0 %v275
    %432 = vmatpush1.msra.mxu0 %v274
    %433 = vmatprep.subr.mxu0 %v271
    %434 = vmatpush1.msra.mxu0 %v270
    %435 = vmatprep.subr.mxu0 %v267
    %436 = vmatpush1.msra.mxu0 %v266
    %437 = vmatprep.subr.mxu0 %v263
    %438 = vmatpush1.msra.mxu0 %v262
    %439 = vmatprep.subr.mxu0 %v259
    %440 = vmatpush1.msra.mxu0 %v258
    %441 = vmatprep.subr.mxu0 %v255
    %442 = vmatpush1.msra.mxu0 %v254
    %443 = vmatprep.subr.mxu0 %v251
    %444 = vmatpush1.msra.mxu0 %v250
    %445 = vmatprep.subr.mxu0 %v247
    %446 = vmatpush1.msra.mxu0 %v246
    %447 = vmatprep.subr.mxu0 %v243
    %448 = vmatpush1.msra.mxu0 %v242
    %449 = vmatprep.subr.mxu0 %v239
    %450 = vmatpush1.msra.mxu0 %v238
    %451 = vmatprep.subr.mxu0 %v235
    %452 = vmatpush1.msra.mxu0 %v234
    %453 = vmatprep.subr.mxu0 %v231
    %454 = vmatpush1.msra.mxu0 %v230
    %455 = vmatprep.subr.mxu0 %v227
    %456 = vmatpush1.msra.mxu0 %v226
    %457 = vmatprep.subr.mxu0 %v351
    %458 = vmatpush2.msra.mxu0 %v350
    %459 = vmatprep.subr.mxu0 %v347
    %460 = vmatpush2.msra.mxu0 %v346
    %461 = vmatprep.subr.mxu0 %v343
    %462 = vmatpush2.msra.mxu0 %v342
    %463 = vmatprep.subr.mxu0 %v339
    %464 = vmatpush2.msra.mxu0 %v338
    %465 = vmatprep.subr.mxu0 %v335
    %466 = vmatpush2.msra.mxu0 %v334
    %467 = vmatprep.subr.mxu0 %v331
    %468 = vmatpush2.msra.mxu0 %v330
    %469 = vmatprep.subr.mxu0 %v327
    %470 = vmatpush2.msra.mxu0 %v326
    %471 = vmatprep.subr.mxu0 %v323
    %472 = vmatpush2.msra.mxu0 %v322
    %473 = vmatprep.subr.mxu0 %v319
    %474 = vmatpush2.msra.mxu0 %v318
    %475 = vmatprep.subr.mxu0 %v315
    %476 = vmatpush2.msra.mxu0 %v314
    %477 = vmatprep.subr.mxu0 %v311
    %478 = vmatpush2.msra.mxu0 %v310
    %479 = vmatprep.subr.mxu0 %v307
    %480 = vmatpush2.msra.mxu0 %v306
    %481 = vmatprep.subr.mxu0 %v303
    %482 = vmatpush2.msra.mxu0 %v302
    %483 = vmatprep.subr.mxu0 %v299
    %484 = vmatpush2.msra.mxu0 %v298
    %485 = vmatprep.subr.mxu0 %v295
    %486 = vmatpush2.msra.mxu0 %v294
    %487 = vmatprep.subr.mxu0 %v291
    %488 = vmatpush2.msra.mxu0 %v290
    %489 = vmatprep.mubr.f32.mxu0 %v423
    %490 = vmatmul.mubr.f32.gmra.mxu0 %v421
    %v491 = vpop.f32.mrf.mxu0
    %v492 = vadd.f32 0.0, %v491
    %v493 = vpop.f32.mrf.mxu0
    %v494 = vadd.f32 0.0, %v493
    %495 = vdwg.mxu0
    %496 = vmatprep.subr.mxu0 %v289
    %497 = vmatpush1.msra.mxu0 %v288
    %498 = vmatprep.subr.mxu0 %v285
    %499 = vmatpush1.msra.mxu0 %v284
    %500 = vmatprep.subr.mxu0 %v281
    %501 = vmatpush1.msra.mxu0 %v280
    %502 = vmatprep.subr.mxu0 %v277
    %503 = vmatpush1.msra.mxu0 %v276
    %504 = vmatprep.subr.mxu0 %v273
    %505 = vmatpush1.msra.mxu0 %v272
    %506 = vmatprep.subr.mxu0 %v269
    %507 = vmatpush1.msra.mxu0 %v268
    %508 = vmatprep.subr.mxu0 %v265
    %509 = vmatpush1.msra.mxu0 %v264
    %510 = vmatprep.subr.mxu0 %v261
    %511 = vmatpush1.msra.mxu0 %v260
    %512 = vmatprep.subr.mxu0 %v257
    %513 = vmatpush1.msra.mxu0 %v256
    %514 = vmatprep.subr.mxu0 %v253
    %515 = vmatpush1.msra.mxu0 %v252
    %516 = vmatprep.subr.mxu0 %v249
    %517 = vmatpush1.msra.mxu0 %v248
    %518 = vmatprep.subr.mxu0 %v245
    %519 = vmatpush1.msra.mxu0 %v244
    %520 = vmatprep.subr.mxu0 %v241
    %521 = vmatpush1.msra.mxu0 %v240
    %522 = vmatprep.subr.mxu0 %v237
    %523 = vmatpush1.msra.mxu0 %v236
    %524 = vmatprep.subr.mxu0 %v233
    %525 = vmatpush1.msra.mxu0 %v232
    %526 = vmatprep.subr.mxu0 %v229
    %527 = vmatpush1.msra.mxu0 %v228
    %528 = vmatprep.subr.mxu0 %v353
    %529 = vmatpush2.msra.mxu0 %v352
    %530 = vmatprep.subr.mxu0 %v349
    %531 = vmatpush2.msra.mxu0 %v348
    %532 = vmatprep.subr.mxu0 %v345
    %533 = vmatpush2.msra.mxu0 %v344
    %534 = vmatprep.subr.mxu0 %v341
    %535 = vmatpush2.msra.mxu0 %v340
    %536 = vmatprep.subr.mxu0 %v337
    %537 = vmatpush2.msra.mxu0 %v336
    %538 = vmatprep.subr.mxu0 %v333
    %539 = vmatpush2.msra.mxu0 %v332
    %540 = vmatprep.subr.mxu0 %v329
    %541 = vmatpush2.msra.mxu0 %v328
    %542 = vmatprep.subr.mxu0 %v325
    %543 = vmatpush2.msra.mxu0 %v324
    %544 = vmatprep.subr.mxu0 %v321
    %545 = vmatpush2.msra.mxu0 %v320
    %546 = vmatprep.subr.mxu0 %v317
    %547 = vmatpush2.msra.mxu0 %v316
    %548 = vmatprep.subr.mxu0 %v313
    %549 = vmatpush2.msra.mxu0 %v312
    %550 = vmatprep.subr.mxu0 %v309
    %551 = vmatpush2.msra.mxu0 %v308
    %552 = vmatprep.subr.mxu0 %v305
    %553 = vmatpush2.msra.mxu0 %v304
    %554 = vmatprep.subr.mxu0 %v301
    %555 = vmatpush2.msra.mxu0 %v300
    %556 = vmatprep.subr.mxu0 %v297
    %557 = vmatpush2.msra.mxu0 %v296
    %558 = vmatprep.subr.mxu0 %v293
    %559 = vmatpush2.msra.mxu0 %v292
    %560 = vmatprep.mubr.f32.mxu0 %v423
    %561 = vmatmul.mubr.f32.gmra.mxu0 %v421
    %v562 = vpop.f32.mrf.mxu0
    %v563 = vadd.f32 0.0, %v562
    %v564 = vpop.f32.mrf.mxu0
    %v565 = vadd.f32 0.0, %v564
    %566 = vdwg.mxu0
    %v567 = vmax.f32 %v492, 0.0
    %v568 = vmax.f32 %v494, 0.0
    %v569 = vmax.f32 %v563, 0.0
    %v570 = vmax.f32 %v565, 0.0
    %v571 = vadd.f32 %v567, %v568
    %v572 = vadd.f32 %v571, %v569
    %v573 = vadd.f32 %v572, %v570
    %574 = vadd.xlane.f32.xlu0 %v573
    %v575 = vpop.xlane.xlu0 %574
    %v576 = vmul.f32 %v567, %v567
    %v577 = vmul.f32 %v568, %v568
    %v578 = vmul.f32 %v569, %v569
    %v579 = vmul.f32 %v570, %v570
    %v580 = vadd.f32 %v576, %v577
    %v581 = vadd.f32 %v580, %v578
    %v582 = vadd.f32 %v581, %v579
    %583 = vadd.xlane.f32.xlu0 %v582
    %v584 = vpop.xlane.xlu0 %583
    %v585 = vmul.f32 %v575, 0.001953125
    %v586 = vmul.f32 %v584, 0.001953125
    %v587 = vmul.f32 %v585, %v585
    %v588 = vsub.f32 %v586, %v587
    %v589 = vmax.f32 %v588, 0.0
    %v590 = vsub.f32 %v567, %v585
    %v591 = vsub.f32 %v568, %v585
    %v592 = vsub.f32 %v569, %v585
    %v593 = vsub.f32 %v570, %v585
    %v594 = vadd.f32 %v589, 1e-05
    %v595 = vrsqrt.pop %v594
    %v596 = vmul.f32 %v590, %v595
    %v597 = vmul.f32 %v591, %v595
    %v598 = vmul.f32 %v592, %v595
    %v599 = vmul.f32 %v593, %v595
    %v600 = vld [vmem:[%s4] sm:$0xff]
    %v601 = vld [vmem:[%s4 + $0x8] sm:$0xff]
    %v602 = vld [vmem:[%s4 + $0x10] sm:$0xff]
    %v603 = vld [vmem:[%s4 + $0x18] sm:$0xff]
    %v604 = vld [vmem:[%s4 + $0x20] sm:$0xff]
    %v605 = vld [vmem:[%s4 + $0x28] sm:$0xff]
    %v606 = vld [vmem:[%s4 + $0x30] sm:$0xff]
    %v607 = vld [vmem:[%s4 + $0x38] sm:$0xff]
    %v608 = vld [vmem:[%s4 + $0x40] sm:$0xff]
    %v609 = vld [vmem:[%s4 + $0x48] sm:$0xff]
    %v610 = vld [vmem:[%s4 + $0x50] sm:$0xff]
    %v611 = vld [vmem:[%s4 + $0x58] sm:$0xff]
    %v612 = vld [vmem:[%s4 + $0x60] sm:$0xff]
    %v613 = vld [vmem:[%s4 + $0x68] sm:$0xff]
    %v614 = vld [vmem:[%s4 + $0x70] sm:$0xff]
    %v615 = vld [vmem:[%s4 + $0x78] sm:$0xff]
    %v616 = vld [vmem:[%s4 + $0x80] sm:$0xff]
    %v617 = vld [vmem:[%s4 + $0x88] sm:$0xff]
    %v618 = vld [vmem:[%s4 + $0x90] sm:$0xff]
    %v619 = vld [vmem:[%s4 + $0x98] sm:$0xff]
    %v620 = vld [vmem:[%s4 + $0xa0] sm:$0xff]
    %v621 = vld [vmem:[%s4 + $0xa8] sm:$0xff]
    %v622 = vld [vmem:[%s4 + $0xb0] sm:$0xff]
    %v623 = vld [vmem:[%s4 + $0xb8] sm:$0xff]
    %v624 = vld [vmem:[%s4 + $0xc0] sm:$0xff]
    %v625 = vld [vmem:[%s4 + $0xc8] sm:$0xff]
    %v626 = vld [vmem:[%s4 + $0xd0] sm:$0xff]
    %v627 = vld [vmem:[%s4 + $0xd8] sm:$0xff]
    %v628 = vld [vmem:[%s4 + $0xe0] sm:$0xff]
    %v629 = vld [vmem:[%s4 + $0xe8] sm:$0xff]
    %v630 = vld [vmem:[%s4 + $0xf0] sm:$0xff]
    %v631 = vld [vmem:[%s4 + $0xf8] sm:$0xff]
    %v632 = vld [vmem:[%s4 + $0x100] sm:$0xff]
    %v633 = vld [vmem:[%s4 + $0x108] sm:$0xff]
    %v634 = vld [vmem:[%s4 + $0x110] sm:$0xff]
    %v635 = vld [vmem:[%s4 + $0x118] sm:$0xff]
    %v636 = vld [vmem:[%s4 + $0x120] sm:$0xff]
    %v637 = vld [vmem:[%s4 + $0x128] sm:$0xff]
    %v638 = vld [vmem:[%s4 + $0x130] sm:$0xff]
    %v639 = vld [vmem:[%s4 + $0x138] sm:$0xff]
    %v640 = vld [vmem:[%s4 + $0x140] sm:$0xff]
    %v641 = vld [vmem:[%s4 + $0x148] sm:$0xff]
    %v642 = vld [vmem:[%s4 + $0x150] sm:$0xff]
    %v643 = vld [vmem:[%s4 + $0x158] sm:$0xff]
    %v644 = vld [vmem:[%s4 + $0x160] sm:$0xff]
    %v645 = vld [vmem:[%s4 + $0x168] sm:$0xff]
    %v646 = vld [vmem:[%s4 + $0x170] sm:$0xff]
    %v647 = vld [vmem:[%s4 + $0x178] sm:$0xff]
    %v648 = vld [vmem:[%s4 + $0x180] sm:$0xff]
    %v649 = vld [vmem:[%s4 + $0x188] sm:$0xff]
    %v650 = vld [vmem:[%s4 + $0x190] sm:$0xff]
    %v651 = vld [vmem:[%s4 + $0x198] sm:$0xff]
    %v652 = vld [vmem:[%s4 + $0x1a0] sm:$0xff]
    %v653 = vld [vmem:[%s4 + $0x1a8] sm:$0xff]
    %v654 = vld [vmem:[%s4 + $0x1b0] sm:$0xff]
    %v655 = vld [vmem:[%s4 + $0x1b8] sm:$0xff]
    %v656 = vld [vmem:[%s4 + $0x1c0] sm:$0xff]
    %v657 = vld [vmem:[%s4 + $0x1c8] sm:$0xff]
    %v658 = vld [vmem:[%s4 + $0x1d0] sm:$0xff]
    %v659 = vld [vmem:[%s4 + $0x1d8] sm:$0xff]
    %v660 = vld [vmem:[%s4 + $0x1e0] sm:$0xff]
    %v661 = vld [vmem:[%s4 + $0x1e8] sm:$0xff]
    %v662 = vld [vmem:[%s4 + $0x1f0] sm:$0xff]
    %v663 = vld [vmem:[%s4 + $0x1f8] sm:$0xff]
    %v664 = vld [vmem:[%s5] sm:$0x1]
    %v666 = vlaneseq
    %v667 = vshrl.u32 %v666, 7
    %v668 = vsub.s32 0, %v667
    %v669 = vrot.slane %v664, %v668
    %671 = vmatprep.subr.mxu0 0.0
    %672 = vmatpush1.msra.mxu0 %v615
    %673 = vmatprep.subr.mxu0 0.0
    %674 = vmatpush1.msra.mxu0 %v614
    %675 = vmatprep.subr.mxu0 0.0
    %676 = vmatpush1.msra.mxu0 %v613
    %677 = vmatprep.subr.mxu0 0.0
    %678 = vmatpush1.msra.mxu0 %v612
    %679 = vmatprep.subr.mxu0 0.0
    %680 = vmatpush1.msra.mxu0 %v611
    %681 = vmatprep.subr.mxu0 0.0
    %682 = vmatpush1.msra.mxu0 %v610
    %683 = vmatprep.subr.mxu0 0.0
    %684 = vmatpush1.msra.mxu0 %v609
    %685 = vmatprep.subr.mxu0 0.0
    %686 = vmatpush1.msra.mxu0 %v608
    %687 = vmatprep.subr.mxu0 0.0
    %688 = vmatpush1.msra.mxu0 %v607
    %689 = vmatprep.subr.mxu0 0.0
    %690 = vmatpush1.msra.mxu0 %v606
    %691 = vmatprep.subr.mxu0 0.0
    %692 = vmatpush1.msra.mxu0 %v605
    %693 = vmatprep.subr.mxu0 0.0
    %694 = vmatpush1.msra.mxu0 %v604
    %695 = vmatprep.subr.mxu0 0.0
    %696 = vmatpush1.msra.mxu0 %v603
    %697 = vmatprep.subr.mxu0 0.0
    %698 = vmatpush1.msra.mxu0 %v602
    %699 = vmatprep.subr.mxu0 0.0
    %700 = vmatpush1.msra.mxu0 %v601
    %701 = vmatprep.subr.mxu0 0.0
    %702 = vmatpush1.msra.mxu0 %v600
    %703 = vmatprep.subr.mxu0 0.0
    %704 = vmatpush2.msra.mxu0 %v631
    %705 = vmatprep.subr.mxu0 0.0
    %706 = vmatpush2.msra.mxu0 %v630
    %707 = vmatprep.subr.mxu0 0.0
    %708 = vmatpush2.msra.mxu0 %v629
    %709 = vmatprep.subr.mxu0 0.0
    %710 = vmatpush2.msra.mxu0 %v628
    %711 = vmatprep.subr.mxu0 0.0
    %712 = vmatpush2.msra.mxu0 %v627
    %713 = vmatprep.subr.mxu0 0.0
    %714 = vmatpush2.msra.mxu0 %v626
    %715 = vmatprep.subr.mxu0 0.0
    %716 = vmatpush2.msra.mxu0 %v625
    %717 = vmatprep.subr.mxu0 0.0
    %718 = vmatpush2.msra.mxu0 %v624
    %719 = vmatprep.subr.mxu0 0.0
    %720 = vmatpush2.msra.mxu0 %v623
    %721 = vmatprep.subr.mxu0 0.0
    %722 = vmatpush2.msra.mxu0 %v622
    %723 = vmatprep.subr.mxu0 0.0
    %724 = vmatpush2.msra.mxu0 %v621
    %725 = vmatprep.subr.mxu0 0.0
    %726 = vmatpush2.msra.mxu0 %v620
    %727 = vmatprep.subr.mxu0 0.0
    %728 = vmatpush2.msra.mxu0 %v619
    %729 = vmatprep.subr.mxu0 0.0
    %730 = vmatpush2.msra.mxu0 %v618
    %731 = vmatprep.subr.mxu0 0.0
    %732 = vmatpush2.msra.mxu0 %v617
    %733 = vmatprep.subr.mxu0 0.0
    %734 = vmatpush2.msra.mxu0 %v616
    %735 = vmatprep.mubr.f32.mxu0 %v597
    %736 = vmatmul.mubr.f32.gmra.mxu0 %v596
    %v737 = vpop.f32.mrf.mxu0
    %v738 = vadd.f32 %v669, %v737
    %v739 = vpop.f32.mrf.mxu0
    %740 = vdwg.mxu0
    %741 = vmatprep.subr.mxu0 0.0
    %742 = vmatpush1.msra.mxu0 %v647
    %743 = vmatprep.subr.mxu0 0.0
    %744 = vmatpush1.msra.mxu0 %v646
    %745 = vmatprep.subr.mxu0 0.0
    %746 = vmatpush1.msra.mxu0 %v645
    %747 = vmatprep.subr.mxu0 0.0
    %748 = vmatpush1.msra.mxu0 %v644
    %749 = vmatprep.subr.mxu0 0.0
    %750 = vmatpush1.msra.mxu0 %v643
    %751 = vmatprep.subr.mxu0 0.0
    %752 = vmatpush1.msra.mxu0 %v642
    %753 = vmatprep.subr.mxu0 0.0
    %754 = vmatpush1.msra.mxu0 %v641
    %755 = vmatprep.subr.mxu0 0.0
    %756 = vmatpush1.msra.mxu0 %v640
    %757 = vmatprep.subr.mxu0 0.0
    %758 = vmatpush1.msra.mxu0 %v639
    %759 = vmatprep.subr.mxu0 0.0
    %760 = vmatpush1.msra.mxu0 %v638
    %761 = vmatprep.subr.mxu0 0.0
    %762 = vmatpush1.msra.mxu0 %v637
    %763 = vmatprep.subr.mxu0 0.0
    %764 = vmatpush1.msra.mxu0 %v636
    %765 = vmatprep.subr.mxu0 0.0
    %766 = vmatpush1.msra.mxu0 %v635
    %767 = vmatprep.subr.mxu0 0.0
    %768 = vmatpush1.msra.mxu0 %v634
    %769 = vmatprep.subr.mxu0 0.0
    %770 = vmatpush1.msra.mxu0 %v633
    %771 = vmatprep.subr.mxu0 0.0
    %772 = vmatpush1.msra.mxu0 %v632
    %773 = vmatprep.subr.mxu0 0.0
    %774 = vmatpush2.msra.mxu0 %v663
    %775 = vmatprep.subr.mxu0 0.0
    %776 = vmatpush2.msra.mxu0 %v662
    %777 = vmatprep.subr.mxu0 0.0
    %778 = vmatpush2.msra.mxu0 %v661
    %779 = vmatprep.subr.mxu0 0.0
    %780 = vmatpush2.msra.mxu0 %v660
    %781 = vmatprep.subr.mxu0 0.0
    %782 = vmatpush2.msra.mxu0 %v659
    %783 = vmatprep.subr.mxu0 0.0
    %784 = vmatpush2.msra.mxu0 %v658
    %785 = vmatprep.subr.mxu0 0.0
    %786 = vmatpush2.msra.mxu0 %v657
    %787 = vmatprep.subr.mxu0 0.0
    %788 = vmatpush2.msra.mxu0 %v656
    %789 = vmatprep.subr.mxu0 0.0
    %790 = vmatpush2.msra.mxu0 %v655
    %791 = vmatprep.subr.mxu0 0.0
    %792 = vmatpush2.msra.mxu0 %v654
    %793 = vmatprep.subr.mxu0 0.0
    %794 = vmatpush2.msra.mxu0 %v653
    %795 = vmatprep.subr.mxu0 0.0
    %796 = vmatpush2.msra.mxu0 %v652
    %797 = vmatprep.subr.mxu0 0.0
    %798 = vmatpush2.msra.mxu0 %v651
    %799 = vmatprep.subr.mxu0 0.0
    %800 = vmatpush2.msra.mxu0 %v650
    %801 = vmatprep.subr.mxu0 0.0
    %802 = vmatpush2.msra.mxu0 %v649
    %803 = vmatprep.subr.mxu0 0.0
    %804 = vmatpush2.msra.mxu0 %v648
    %805 = vmatprep.mubr.f32.mxu0 %v599
    %806 = vmatmul.mubr.f32.gmra.mxu0 %v598
    %v807 = vpop.f32.mrf.mxu0
    %v808 = vadd.f32 %v738, %v807
    %v809 = vpop.f32.mrf.mxu0
    %810 = vdwg.mxu0
    %811 = vst.msk [vmem:[#allocation5] sm:$0xff] %vm56, %v808
    // Predicated region
    $region30: #{tpu_custom_call.1} parent=1 // pred_check
      _
    $region31: #{tpu_custom_call.1} parent=1 // pred_check_branch
      %813 = sbr.rel (0) target = $region33
    $region32: #{tpu_custom_call.1} parent=1 // pred_region
      %s815 = ssub.s32 128, 128
      %816 = vsyncadd [#allocation4], %s815
      %s818 = sshll.u32 [#allocation5], 4
      %s819 = int_to_ptr.vmem [resolvable:$true] %s818
      %821 = dma.vmem_to_hbm [thread:$0]  %s819, 128, %s6, [#allocation4]
    $region33: #{tpu_custom_call.1} parent=1 // pred_fallthru
      _
    // Predicated region
    $region34: #{tpu_custom_call.1} parent=1 // pred_check
      _
    $region35: #{tpu_custom_call.1} parent=1 // pred_check_branch
      %823 = sbr.rel (0) target = $region37
    $region36: #{tpu_custom_call.1} parent=1 // pred_region
      %824 = dma.done [#allocation4], 128
    $region37: #{tpu_custom_call.1} parent=1 // pred_fallthru
      _
    %825 = vsyncpa [#allocation3], 1
    %826 = vsyncpa [#allocation4], 1

</llo_original>
